<compile_context>
chip_gen: v5e
topology: v5e:2x2
jax: 0.10.0
libtpu: 0.0.40
codegen_flags: <defaults>
</compile_context>

<pallas_src>
import numpy as np
import jax
import jax.numpy as jnp
from jax import lax
from jax.experimental import pallas as pl
from jax.experimental.pallas import tpu as pltpu


# -----------------------------------------------------------------------------
# 1-D bilinear interpolation matrices (PyTorch F.interpolate, align_corners=False)
# -----------------------------------------------------------------------------
def _bilinear_matrix_1d(out_size: int, in_size: int) -> np.ndarray:
    m = np.zeros((out_size, in_size), dtype=np.float32)
    if in_size == 1:
        m[:, 0] = 1.0
        return m
    scale = in_size / out_size
    for o in range(out_size):
        src = (o + 0.5) * scale - 0.5
        src = max(src, 0.0)
        i0 = min(int(np.floor(src)), in_size - 1)
        i1 = min(i0 + 1, in_size - 1)
        lam = src - i0
        m[o, i0] += 1.0 - lam
        m[o, i1] += lam
    return m


# -----------------------------------------------------------------------------
# Pallas kernel: SHE forward hot path for one (Bb, K, H, W) logits block
# -----------------------------------------------------------------------------
def _she_kernel(lg_ref, emb_ref, mhd_ref, mwtd_ref, pat_ref, mhu_ref, mwtu_ref,
                out_ref):
    Bb, K, H, W = lg_ref.shape                 # logits block (Bb, classes, H, W) f32
    h = mhd_ref.shape[0]                       # low-res height
    w = mwtd_ref.shape[1]                      # low-res width

    mhd = mhd_ref[...]                         # (h, H)  f32 (argmax path stays f32)
    mwtd = mwtd_ref[...]                       # (W, w)  f32
    pat = pat_ref[...]                         # (K, C)  bf16
    mhu = mhu_ref[...]                         # (H, h)  bf16
    mwtu = mwtu_ref[...]                       # (w, W)  bf16

    # ---- separable bilinear downsample of the logits (f32, feeds the argmax) ----
    # Stage 1 (contract W): one big MXU dot over the whole block, M = Bb*K*H.
    a = jnp.dot(lg_ref[...].reshape(Bb * K * H, W), mwtd,
                preferred_element_type=jnp.float32)              # (Bb*K*H, w)
    # Stage 2 (contract H): single batched dot_general over the Bb*K class maps.
    mhd_b = jnp.broadcast_to(mhd, (Bb * K, h, H))                # hoisted out of bb loop
    v = jnp.einsum("khH,kHw->khw", mhd_b, a.reshape(Bb * K, H, w),
                   preferred_element_type=jnp.float32)           # (Bb*K, h, w)
    v = v.reshape(Bb, K, h, w)

    for bb in range(Bb):        # Bb is small & static; use lax.fori_loop if it grows
        # ---- Hopfield energies against every class pattern on the MXU ----
        # (K, C) bf16 @ (C, h*w) bf16 -> (K, h*w) f32, pixels on lanes.
        scores = jnp.dot(pat, emb_ref[bb], preferred_element_type=jnp.float32)
        # One vectorized compiler retile replaces the old K*h masked-store loop.
        scores3 = scores.reshape(K, h, w)

        # ---- fused argmax + per-pixel pattern-score selection ----
        # Strict '>' keeps the FIRST max (torch.argmax tie-breaking); carrying the
        # selected score removes the separate one-hot selection pass entirely.
        best = v[bb, 0]
        sel = scores3[0]
        for k in range(1, K):   # TODO(synk): lax.fori_loop(unroll=small) at realistic K
            vk = v[bb, k]
            take = vk > best
            best = jnp.where(take, vk, best)
            sel = jnp.where(take, scores3[k], sel)

        # ---- separable bilinear upsample (bf16 operands, f32 accumulation) ----
        t = jnp.dot(mhu, sel.astype(jnp.bfloat16),
                    preferred_element_type=jnp.float32)           # (H, w)
        out_ref[bb] = jnp.dot(t.astype(jnp.bfloat16), mwtu,
                              preferred_element_type=jnp.float32)  # (H, W) lane-dense-ish


# -----------------------------------------------------------------------------
# Synthetic segmenter stand-in (PretrainedSegmenter is external to SHEModel)
# -----------------------------------------------------------------------------
def init_params(key, in_ch, num_classes, hidden_dim):
    k1, k2, k3, k4 = jax.random.split(key, 4)
    return {
        "w_logits": jax.random.normal(k1, (num_classes, in_ch), jnp.float32) * 0.5,
        "b_logits": jax.random.normal(k2, (num_classes,), jnp.float32) * 0.1,
        "w_hidden": jax.random.normal(k3, (hidden_dim, in_ch), jnp.float32) * 0.5,
        # self.patterns: (num_classes, hidden_dim); fit() would estimate it from data.
        "patterns": jax.random.normal(k4, (num_classes, hidden_dim), jnp.float32),
    }


def synthetic_segmenter(x, params):
    hp = lax.Precision.HIGHEST
    logits = jnp.einsum("kc,bchw->bkhw", params["w_logits"], x, precision=hp)
    logits = logits + params["b_logits"][None, :, None, None]
    b, c, h, w = x.shape
    pooled = x.reshape(b, c, h // 2, 2, w // 2, 2).mean(axis=(3, 5))
    hidden = jnp.einsum("dc,bchw->bdhw", params["w_hidden"], pooled, precision=hp)
    return logits, hidden


# -----------------------------------------------------------------------------
# SHEModel.forward
# -----------------------------------------------------------------------------
def she_forward(x, params, *, batch_block=1):
    logits, hidden = synthetic_segmenter(x, params)     # NCHW: (B,K,H,W), (B,C,h,w)
    B, K, H, W = logits.shape
    _, C, h, w = hidden.shape
    Bb = batch_block
    assert B % Bb == 0

    # Logits consumed NCHW-native; hidden only collapses its contiguous (h, w) dims.
    # bf16 inputs for the non-argmax matmuls also halve their DMA bytes.
    emb_flat = hidden.reshape(B, C, h * w).astype(jnp.bfloat16)
    patterns = params["patterns"].astype(jnp.bfloat16)            # (K, C)

    # Tiny separable interpolation operators (KiB-scale, constant across the grid).
    mh_d = jnp.asarray(_bilinear_matrix_1d(h, H))                  # (h, H) f32
    mwt_d = jnp.asarray(_bilinear_matrix_1d(w, W).T)               # (W, w) f32
    mh_u = jnp.asarray(_bilinear_matrix_1d(H, h)).astype(jnp.bfloat16)     # (H, h)
    mwt_u = jnp.asarray(_bilinear_matrix_1d(W, w).T).astype(jnp.bfloat16)  # (w, W)

    flops_img = 2 * (K * H * W * w            # downsample stage 1
                     + K * h * H * w          # downsample stage 2
                     + K * C * h * w          # Hopfield scores
                     + H * h * w + H * w * W)  # upsample
    bytes_acc = (4 * B * K * H * W + 2 * B * C * h * w + 4 * B * H * W
                 + 4 * (h * H + W * w) + 2 * (K * C + H * h + w * W))

    ood = pl.pallas_call(
        _she_kernel,
        out_shape=jax.ShapeDtypeStruct((B, H, W), jnp.float32),
        grid_spec=pltpu.PrefetchScalarGridSpec(
            num_scalar_prefetch=0,
            grid=(B // Bb,),
            in_specs=[
                pl.BlockSpec((Bb, K, H, W), lambda b: (b, 0, 0, 0)),   # logits (NCHW)
                pl.BlockSpec((Bb, C, h * w), lambda b: (b, 0, 0)),     # embeddings bf16
                pl.BlockSpec((h, H), lambda b: (0, 0)),                # Mh_down   f32
                pl.BlockSpec((W, w), lambda b: (0, 0)),                # Mw_down^T f32
                pl.BlockSpec((K, C), lambda b: (0, 0)),                # patterns  bf16
                pl.BlockSpec((H, h), lambda b: (0, 0)),                # Mh_up     bf16
                pl.BlockSpec((w, W), lambda b: (0, 0)),                # Mw_up^T   bf16
            ],
            out_specs=pl.BlockSpec((Bb, H, W), lambda b: (b, 0, 0)),
        ),
        compiler_params=pltpu.CompilerParams(
            dimension_semantics=("parallel",),        # batch shards over 2 TCs on v7x
            # <= ~48 MiB keeps headroom on v7x (64 MiB); raise towards 64-100 MiB on
            # v5e/v6e (128 MiB) once real-resolution H tiles are enlarged there.
            vmem_limit_bytes=48 * 1024 * 1024,
        ),
        cost_estimate=pl.CostEstimate(
            flops=B * flops_img, transcendentals=0, bytes_accessed=bytes_acc),
    )(logits, emb_flat, mh_d, mwt_d, patterns, mh_u, mwt_u)

    ood_scores = ood.reshape(B, 1, H, W)
    return logits, ood_scores


# Pure-JAX f32 reference (mirrors the PyTorch forward) for a numerical sanity check.
def she_reference(x, params):
    hp = lax.Precision.HIGHEST
    logits, hidden = synthetic_segmenter(x, params)
    B, K, H, W = logits.shape
    _, C, h, w = hidden.shape
    mh_d = jnp.asarray(_bilinear_matrix_1d(h, H))
    mw_d = jnp.asarray(_bilinear_matrix_1d(w, W))
    mh_u = jnp.asarray(_bilinear_matrix_1d(H, h))
    mw_u = jnp.asarray(_bilinear_matrix_1d(W, w))
    lg_ds = jnp.einsum("hH,bkHW,wW->bkhw", mh_d, logits, mw_d, precision=hp)
    preds = jnp.argmax(lg_ds, axis=1)                    # (B, h, w)
    emb = jnp.transpose(hidden, (0, 2, 3, 1))            # (B, h, w, C)
    sel = params["patterns"][preds]                      # (B, h, w, C)
    ood = jnp.sum(emb * sel, axis=-1)                    # (B, h, w)
    ood_up = jnp.einsum("Hh,bhw,Ww->bHW", mh_u, ood, mw_u, precision=hp)
    return logits, ood_up.reshape(B, 1, H, W)


if __name__ == "__main__":
    B, C_in, H, W = 2, 3, 16, 16
    num_classes, hidden_dim = 4, 32

    key = jax.random.PRNGKey(0)
    k_param, k_x = jax.random.split(key)
    params = init_params(k_param, C_in, num_classes, hidden_dim)
    x = jax.random.normal(k_x, (B, C_in, H, W), jnp.float32)

    logits, ood = jax.jit(she_forward)(x, params)
    jax.block_until_ready((logits, ood))

    ref_logits, ref_ood = she_reference(x, params)
    assert logits.shape == (B, num_classes, H, W)
    assert ood.shape == (B, 1, H, W)
    # Tolerance reflects bf16 operands (f32 accumulation) on the Hopfield/upsample
    # matmuls; the argmax/downsample path is kept in f32 and matches exactly.
    assert np.allclose(np.asarray(ood), np.asarray(ref_ood), rtol=3e-2, atol=3e-2)

    print("KERNEL_OK")
</pallas_src>

<mosaic_0001>
module attributes {stable_mosaic.version = 11 : i64} {
  func.func @_she_kernel(%arg0: i32, %arg1: memref<1x4x16x16xf32, #tpu.memory_space<vmem>>, %arg2: memref<1x32x64xbf16, #tpu.memory_space<vmem>>, %arg3: memref<8x16xf32, #tpu.memory_space<vmem>>, %arg4: memref<16x8xf32, #tpu.memory_space<vmem>>, %arg5: memref<4x32xbf16, #tpu.memory_space<vmem>>, %arg6: memref<16x8xbf16, #tpu.memory_space<vmem>>, %arg7: memref<8x16xbf16, #tpu.memory_space<vmem>>, %arg8: memref<1x16x16xf32, #tpu.memory_space<vmem>>) attributes {dimension_semantics = [#tpu.dimension_semantics<parallel>], iteration_bounds = array<i64: 2>, scalar_prefetch = 0 : i64, scratch_operands = 0 : i64, tpu.core_type = #tpu.core_type<tc>, window_params = [{transform_indices = @transform_0, window_bounds = array<i64: 1, 4, 16, 16>}, {transform_indices = @transform_1, window_bounds = array<i64: 1, 32, 64>}, {pipeline_mode = #tpu.pipeline_mode<synchronous>, transform_indices = @transform_2, window_bounds = array<i64: 8, 16>}, {pipeline_mode = #tpu.pipeline_mode<synchronous>, transform_indices = @transform_3, window_bounds = array<i64: 16, 8>}, {pipeline_mode = #tpu.pipeline_mode<synchronous>, transform_indices = @transform_4, window_bounds = array<i64: 4, 32>}, {pipeline_mode = #tpu.pipeline_mode<synchronous>, transform_indices = @transform_5, window_bounds = array<i64: 16, 8>}, {pipeline_mode = #tpu.pipeline_mode<synchronous>, transform_indices = @transform_6, window_bounds = array<i64: 8, 16>}, {transform_indices = @transform_7, window_bounds = array<i64: 1, 16, 16>}]} {
    %c0 = arith.constant 0 : index
    %c0_0 = arith.constant 0 : index
    %0 = vector.load %arg3[%c0, %c0_0] : memref<8x16xf32, #tpu.memory_space<vmem>>, vector<8x16xf32>
    %c0_1 = arith.constant 0 : index
    %c0_2 = arith.constant 0 : index
    %1 = vector.load %arg4[%c0_1, %c0_2] : memref<16x8xf32, #tpu.memory_space<vmem>>, vector<16x8xf32>
    %c0_3 = arith.constant 0 : index
    %c0_4 = arith.constant 0 : index
    %2 = vector.load %arg5[%c0_3, %c0_4] : memref<4x32xbf16, #tpu.memory_space<vmem>>, vector<4x32xbf16>
    %c0_5 = arith.constant 0 : index
    %c0_6 = arith.constant 0 : index
    %3 = vector.load %arg6[%c0_5, %c0_6] : memref<16x8xbf16, #tpu.memory_space<vmem>>, vector<16x8xbf16>
    %c0_7 = arith.constant 0 : index
    %c0_8 = arith.constant 0 : index
    %4 = vector.load %arg7[%c0_7, %c0_8] : memref<8x16xbf16, #tpu.memory_space<vmem>>, vector<8x16xbf16>
    %c0_9 = arith.constant 0 : index
    %c0_10 = arith.constant 0 : index
    %c0_11 = arith.constant 0 : index
    %c0_12 = arith.constant 0 : index
    %5 = vector.load %arg1[%c0_9, %c0_10, %c0_11, %c0_12] : memref<1x4x16x16xf32, #tpu.memory_space<vmem>>, vector<1x4x16x16xf32>
    %6 = vector.shape_cast %5 : vector<1x4x16x16xf32> to vector<64x16xf32>
    %cst = arith.constant dense<0.000000e+00> : vector<64x8xf32>
    %7 = tpu.matmul %6, %1, %cst {dimension_numbers = #tpu.dot_dimension_numbers<[1], [0], [0], [1], [0, 0, 1, 1], [], []>} : vector<64x16xf32>, vector<16x8xf32>, vector<64x8xf32> -> vector<64x8xf32>
    %8 = vector.shape_cast %0 : vector<8x16xf32> to vector<1x8x16xf32>
    %9 = vector.broadcast %8 : vector<1x8x16xf32> to vector<4x8x16xf32>
    %10 = vector.shape_cast %7 : vector<64x8xf32> to vector<4x16x8xf32>
    "tpu.trace_start"() <{level = 10 : i32, message = "khH,kHw->khw"}> : () -> ()
    %cst_13 = arith.constant dense<0.000000e+00> : vector<4x8x8xf32>
    %11 = tpu.matmul %9, %10, %cst_13 {dimension_numbers = #tpu.dot_dimension_numbers<[2], [1], [1], [2], [0, 0, 0, 1, 1, 2], [0], [0]>} : vector<4x8x16xf32>, vector<4x16x8xf32>, vector<4x8x8xf32> -> vector<4x8x8xf32>
    "tpu.trace_stop"() : () -> ()
    %12 = vector.shape_cast %11 : vector<4x8x8xf32> to vector<1x4x8x8xf32>
    %c0_14 = arith.constant 0 : index
    %c0_15 = arith.constant 0 : index
    %c0_16 = arith.constant 0 : index
    %13 = vector.load %arg2[%c0_14, %c0_15, %c0_16] : memref<1x32x64xbf16, #tpu.memory_space<vmem>>, vector<1x32x64xbf16>
    %14 = vector.shape_cast %13 : vector<1x32x64xbf16> to vector<32x64xbf16>
    %cst_17 = arith.constant dense<0.000000e+00> : vector<4x64xf32>
    %15 = tpu.matmul %2, %14, %cst_17 {dimension_numbers = #tpu.dot_dimension_numbers<[1], [0], [0], [1], [0, 0, 1, 1], [], []>} : vector<4x32xbf16>, vector<32x64xbf16>, vector<4x64xf32> -> vector<4x64xf32>
    %16 = vector.shape_cast %15 : vector<4x64xf32> to vector<4x8x8xf32>
    %17 = vector.extract_strided_slice %12 {offsets = [0, 0, 0, 0], sizes = [1, 1, 8, 8], strides = [1, 1, 1, 1]} : vector<1x4x8x8xf32> to vector<1x1x8x8xf32>
    %18 = vector.shape_cast %17 : vector<1x1x8x8xf32> to vector<8x8xf32>
    %19 = vector.extract_strided_slice %16 {offsets = [0, 0, 0], sizes = [1, 8, 8], strides = [1, 1, 1]} : vector<4x8x8xf32> to vector<1x8x8xf32>
    %20 = vector.shape_cast %19 : vector<1x8x8xf32> to vector<8x8xf32>
    %21 = vector.extract_strided_slice %12 {offsets = [0, 1, 0, 0], sizes = [1, 1, 8, 8], strides = [1, 1, 1, 1]} : vector<1x4x8x8xf32> to vector<1x1x8x8xf32>
    %22 = vector.shape_cast %21 : vector<1x1x8x8xf32> to vector<8x8xf32>
    %23 = arith.cmpf ogt, %22, %18 : vector<8x8xf32>
    %24 = arith.select %23, %22, %18 : vector<8x8xi1>, vector<8x8xf32>
    %25 = vector.extract_strided_slice %16 {offsets = [1, 0, 0], sizes = [1, 8, 8], strides = [1, 1, 1]} : vector<4x8x8xf32> to vector<1x8x8xf32>
    %26 = vector.shape_cast %25 : vector<1x8x8xf32> to vector<8x8xf32>
    %27 = arith.select %23, %26, %20 : vector<8x8xi1>, vector<8x8xf32>
    %28 = vector.extract_strided_slice %12 {offsets = [0, 2, 0, 0], sizes = [1, 1, 8, 8], strides = [1, 1, 1, 1]} : vector<1x4x8x8xf32> to vector<1x1x8x8xf32>
    %29 = vector.shape_cast %28 : vector<1x1x8x8xf32> to vector<8x8xf32>
    %30 = arith.cmpf ogt, %29, %24 : vector<8x8xf32>
    %31 = arith.select %30, %29, %24 : vector<8x8xi1>, vector<8x8xf32>
    %32 = vector.extract_strided_slice %16 {offsets = [2, 0, 0], sizes = [1, 8, 8], strides = [1, 1, 1]} : vector<4x8x8xf32> to vector<1x8x8xf32>
    %33 = vector.shape_cast %32 : vector<1x8x8xf32> to vector<8x8xf32>
    %34 = arith.select %30, %33, %27 : vector<8x8xi1>, vector<8x8xf32>
    %35 = vector.extract_strided_slice %12 {offsets = [0, 3, 0, 0], sizes = [1, 1, 8, 8], strides = [1, 1, 1, 1]} : vector<1x4x8x8xf32> to vector<1x1x8x8xf32>
    %36 = vector.shape_cast %35 : vector<1x1x8x8xf32> to vector<8x8xf32>
    %37 = arith.cmpf ogt, %36, %31 : vector<8x8xf32>
    %38 = vector.extract_strided_slice %16 {offsets = [3, 0, 0], sizes = [1, 8, 8], strides = [1, 1, 1]} : vector<4x8x8xf32> to vector<1x8x8xf32>
    %39 = vector.shape_cast %38 : vector<1x8x8xf32> to vector<8x8xf32>
    %40 = arith.select %37, %39, %34 : vector<8x8xi1>, vector<8x8xf32>
    %41 = arith.truncf %40 : vector<8x8xf32> to vector<8x8xbf16>
    %cst_18 = arith.constant dense<0.000000e+00> : vector<16x8xf32>
    %42 = tpu.matmul %3, %41, %cst_18 {dimension_numbers = #tpu.dot_dimension_numbers<[1], [0], [0], [1], [0, 0, 1, 1], [], []>} : vector<16x8xbf16>, vector<8x8xbf16>, vector<16x8xf32> -> vector<16x8xf32>
    %43 = arith.truncf %42 : vector<16x8xf32> to vector<16x8xbf16>
    %cst_19 = arith.constant dense<0.000000e+00> : vector<16x16xf32>
    %44 = tpu.matmul %43, %4, %cst_19 {dimension_numbers = #tpu.dot_dimension_numbers<[1], [0], [0], [1], [0, 0, 1, 1], [], []>} : vector<16x8xbf16>, vector<8x16xbf16>, vector<16x16xf32> -> vector<16x16xf32>
    %c0_20 = arith.constant 0 : index
    %c0_21 = arith.constant 0 : index
    %c0_22 = arith.constant 0 : index
    %45 = vector.load %arg8[%c0_20, %c0_21, %c0_22] : memref<1x16x16xf32, #tpu.memory_space<vmem>>, vector<1x16x16xf32>
    %46 = vector.shape_cast %45 : vector<1x16x16xf32> to vector<16x16xf32>
    %47 = vector.shape_cast %44 : vector<16x16xf32> to vector<1x16x16xf32>
    tpu.vector_store %arg8[%c0_20, %c0_21, %c0_22], %47 {strides = array<i32>} : memref<1x16x16xf32, #tpu.memory_space<vmem>>, vector<1x16x16xf32>,
    return
  }
  func.func @transform_0(%arg0: i32) -> (i32, i32, i32, i32) {
    %c0_i32 = arith.constant 0 : i32
    %c0_i32_0 = arith.constant 0 : i32
    %c0_i32_1 = arith.constant 0 : i32
    %c0_i32_2 = arith.constant 0 : i32
    return %arg0, %c0_i32, %c0_i32_0, %c0_i32_1 : i32, i32, i32, i32
  }
  func.func @transform_1(%arg0: i32) -> (i32, i32, i32) {
    %c0_i32 = arith.constant 0 : i32
    %c0_i32_0 = arith.constant 0 : i32
    %c0_i32_1 = arith.constant 0 : i32
    return %arg0, %c0_i32, %c0_i32_0 : i32, i32, i32
  }
  func.func @transform_2(%arg0: i32) -> (i32, i32) {
    %c0_i32 = arith.constant 0 : i32
    %c0_i32_0 = arith.constant 0 : i32
    %c0_i32_1 = arith.constant 0 : i32
    return %c0_i32, %c0_i32_0 : i32, i32
  }
  func.func @transform_3(%arg0: i32) -> (i32, i32) {
    %c0_i32 = arith.constant 0 : i32
    %c0_i32_0 = arith.constant 0 : i32
    %c0_i32_1 = arith.constant 0 : i32
    return %c0_i32, %c0_i32_0 : i32, i32
  }
  func.func @transform_4(%arg0: i32) -> (i32, i32) {
    %c0_i32 = arith.constant 0 : i32
    %c0_i32_0 = arith.constant 0 : i32
    %c0_i32_1 = arith.constant 0 : i32
    return %c0_i32, %c0_i32_0 : i32, i32
  }
  func.func @transform_5(%arg0: i32) -> (i32, i32) {
    %c0_i32 = arith.constant 0 : i32
    %c0_i32_0 = arith.constant 0 : i32
    %c0_i32_1 = arith.constant 0 : i32
    return %c0_i32, %c0_i32_0 : i32, i32
  }
  func.func @transform_6(%arg0: i32) -> (i32, i32) {
    %c0_i32 = arith.constant 0 : i32
    %c0_i32_0 = arith.constant 0 : i32
    %c0_i32_1 = arith.constant 0 : i32
    return %c0_i32, %c0_i32_0 : i32, i32
  }
  func.func @transform_7(%arg0: i32) -> (i32, i32, i32) {
    %c0_i32 = arith.constant 0 : i32
    %c0_i32_0 = arith.constant 0 : i32
    %c0_i32_1 = arith.constant 0 : i32
    return %arg0, %c0_i32, %c0_i32_0 : i32, i32, i32
  }
}

</mosaic_0001>

<llo_original>
// kernel: she_forward.1
$region0: #{she_forward.1}
  #allocation0 [shape = 'u32[]', space=smem, size = 0x4, offset = 0x4, fixed_abs, tag = 'smem constant byte address 0x4 - core index']
  #allocation1 [shape = 'u32[72,128]{1,0:T(1,128)}', space=vmem, size = 0x9000, scoped, tag = 'internal scratch']
  %s0 = inlined_call_operand.vmem [shape: f32[2,4,16,16], index: 0, kind: input, shape index: {}]
  %s1 = inlined_call_operand.vmem [shape: bf16[2,32,64], index: 1, kind: input, shape index: {}]
  %s2 = inlined_call_operand.vmem [shape: f32[8,16], index: 2, kind: input, shape index: {}]
  %s3 = inlined_call_operand.vmem [shape: f32[16,8], index: 3, kind: input, shape index: {}]
  %s4 = inlined_call_operand.vmem [shape: bf16[4,32], index: 4, kind: input, shape index: {}]
  %s5 = inlined_call_operand.vmem [shape: bf16[16,8], index: 5, kind: input, shape index: {}]
  %s6 = inlined_call_operand.vmem [shape: bf16[8,16], index: 6, kind: input, shape index: {}]
  %s7 = inlined_call_operand.hbm [shape: f32[2,16,16], index: 7, kind: output, shape index: {}]
  %s8 = sld [smem:[#allocation0]]
  $region61: #{she_forward.1} parent=0
    _
  %s10 = ssub.s32 1, %s8
  %s11 = scalar_select 0, %s10, %s8
  $region1: #{she_forward.1} parent=0
    #allocation2 [shape = 'u8[16384]{0}', space=vmem, size = 0x4000, scoped, tag = 'output window, operand 0']
    #allocation3 [shape = 's32[2]{0}', space=sflag, size = 0x8, scoped, tag = 'scoped memory for she_forward.1']
    %12 = vsyncpa [#allocation3], 0
    %s13 = scalar_lea.sflag [#allocation3], 1
    %14 = vsyncpa %s13, 0
    loop: start=0, step=1, limit=4
    $region2: #{she_forward.1} parent=1 // loop_pre_header
      _
    $region3: #{she_forward.1} parent=1 // loop_header
      %s16 = sphi 0, %s20
      %p17 = scmp.ge.s32.totalorder %s16, 4
      %s26 = sphi 0, %s28
      %s29 = sphi 0, %s26
      %s30 = sphi 0, %s29
      %s46 = sphi 0, %s30
      %s52 = sphi 0, %s54
      %s55 = sphi 0, %s52
      %s56 = sphi 0, %s55
      %s72 = sphi 0, %s56
      %s76 = sphi 0, %s76
      %s78 = sphi 0, %s76
      %s79 = sphi 0, %s78
      %s93 = sphi 0, %s79
      %s97 = sphi 0, %s97
      %s99 = sphi 0, %s97
      %s100 = sphi 0, %s99
      %s114 = sphi 0, %s100
      %s118 = sphi 0, %s118
      %s120 = sphi 0, %s118
      %s121 = sphi 0, %s120
      %s135 = sphi 0, %s121
      %s139 = sphi 0, %s139
      %s141 = sphi 0, %s139
      %s142 = sphi 0, %s141
      %s156 = sphi 0, %s142
      %s160 = sphi 0, %s160
      %s162 = sphi 0, %s160
      %s163 = sphi 0, %s162
      %s177 = sphi 0, %s163
      %s183 = sphi 0, %s185
      %s186 = sphi 0, %s183
      %s187 = sphi 0, %s186
      %s203 = sphi 0, %s187
    $region4: #{she_forward.1} parent=1 // loop_header_branch
      %19 = sbr.rel (%p17) target = $region8
    $region5: #{she_forward.1} parent=1 // loop_body
      %s21 = ssub.s32 %s16, 1
      %s22 = ssub.s32 %s16, 2
      %s23 = sadd.s32 %s16, 1
      %s24 = ssub.s32 %s16, %s23
      %p25 = scmp.eq.s32.totalorder %s24, 0
      %s27 = sadd.s32 %s26, 1
      %s28 = scalar_select %p25, %s26, %s27
      %p31 = pneg %p25
      %p32 = scmp.eq.s32.totalorder %s16, 1
      %p33 = por %p31, %p32
      %p34 = scmp.ne.s32.totalorder %s26, %s29
      %p35 = scmp.eq.s32.totalorder %s16, 0
      %p36 = por %p34, %p35
      %p37 = scmp.ne.s32.totalorder %s26, %s29
      %p38 = scmp.eq.s32.totalorder %s21, 1
      %p39 = por %p37, %p38
      %p40 = scmp.ne.s32.totalorder %s29, %s30
      %p41 = scmp.eq.s32.totalorder %s21, 0
      %p42 = por %p40, %p41
      %p43 = scmp.ne.s32.totalorder %s29, %s30
      %p44 = scmp.eq.s32.totalorder %s22, 1
      %p45 = por %p43, %p44
      %p47 = scmp.ne.s32.totalorder %s30, %s46
      %p48 = scmp.eq.s32.totalorder %s22, 0
      %p49 = por %p47, %p48
      %s50 = ssub.s32 %s16, %s23
      %p51 = scmp.eq.s32.totalorder %s50, 0
      %s53 = sadd.s32 %s52, 1
      %s54 = scalar_select %p51, %s52, %s53
      %p57 = pneg %p51
      %p58 = scmp.eq.s32.totalorder %s16, 1
      %p59 = por %p57, %p58
      %p60 = scmp.ne.s32.totalorder %s52, %s55
      %p61 = scmp.eq.s32.totalorder %s16, 0
      %p62 = por %p60, %p61
      %p63 = scmp.ne.s32.totalorder %s52, %s55
      %p64 = scmp.eq.s32.totalorder %s21, 1
      %p65 = por %p63, %p64
      %p66 = scmp.ne.s32.totalorder %s55, %s56
      %p67 = scmp.eq.s32.totalorder %s21, 0
      %p68 = por %p66, %p67
      %p69 = scmp.ne.s32.totalorder %s55, %s56
      %p70 = scmp.eq.s32.totalorder %s22, 1
      %p71 = por %p69, %p70
      %p73 = scmp.ne.s32.totalorder %s56, %s72
      %p74 = scmp.eq.s32.totalorder %s22, 0
      %p75 = por %p73, %p74
      %s77 = sadd.s32 %s76, 1
      %p80 = scmp.eq.s32.totalorder %s16, 1
      %p81 = scmp.ne.s32.totalorder %s76, %s78
      %p82 = scmp.eq.s32.totalorder %s16, 0
      %p83 = por %p81, %p82
      %p84 = scmp.ne.s32.totalorder %s76, %s78
      %p85 = scmp.eq.s32.totalorder %s21, 1
      %p86 = por %p84, %p85
      %p87 = scmp.ne.s32.totalorder %s78, %s79
      %p88 = scmp.eq.s32.totalorder %s21, 0
      %p89 = por %p87, %p88
      %p90 = scmp.ne.s32.totalorder %s78, %s79
      %p91 = scmp.eq.s32.totalorder %s22, 1
      %p92 = por %p90, %p91
      %p94 = scmp.ne.s32.totalorder %s79, %s93
      %p95 = scmp.eq.s32.totalorder %s22, 0
      %p96 = por %p94, %p95
      %s98 = sadd.s32 %s97, 1
      %p101 = scmp.eq.s32.totalorder %s16, 1
      %p102 = scmp.ne.s32.totalorder %s97, %s99
      %p103 = scmp.eq.s32.totalorder %s16, 0
      %p104 = por %p102, %p103
      %p105 = scmp.ne.s32.totalorder %s97, %s99
      %p106 = scmp.eq.s32.totalorder %s21, 1
      %p107 = por %p105, %p106
      %p108 = scmp.ne.s32.totalorder %s99, %s100
      %p109 = scmp.eq.s32.totalorder %s21, 0
      %p110 = por %p108, %p109
      %p111 = scmp.ne.s32.totalorder %s99, %s100
      %p112 = scmp.eq.s32.totalorder %s22, 1
      %p113 = por %p111, %p112
      %p115 = scmp.ne.s32.totalorder %s100, %s114
      %p116 = scmp.eq.s32.totalorder %s22, 0
      %p117 = por %p115, %p116
      %s119 = sadd.s32 %s118, 1
      %p122 = scmp.eq.s32.totalorder %s16, 1
      %p123 = scmp.ne.s32.totalorder %s118, %s120
      %p124 = scmp.eq.s32.totalorder %s16, 0
      %p125 = por %p123, %p124
      %p126 = scmp.ne.s32.totalorder %s118, %s120
      %p127 = scmp.eq.s32.totalorder %s21, 1
      %p128 = por %p126, %p127
      %p129 = scmp.ne.s32.totalorder %s120, %s121
      %p130 = scmp.eq.s32.totalorder %s21, 0
      %p131 = por %p129, %p130
      %p132 = scmp.ne.s32.totalorder %s120, %s121
      %p133 = scmp.eq.s32.totalorder %s22, 1
      %p134 = por %p132, %p133
      %p136 = scmp.ne.s32.totalorder %s121, %s135
      %p137 = scmp.eq.s32.totalorder %s22, 0
      %p138 = por %p136, %p137
      %s140 = sadd.s32 %s139, 1
      %p143 = scmp.eq.s32.totalorder %s16, 1
      %p144 = scmp.ne.s32.totalorder %s139, %s141
      %p145 = scmp.eq.s32.totalorder %s16, 0
      %p146 = por %p144, %p145
      %p147 = scmp.ne.s32.totalorder %s139, %s141
      %p148 = scmp.eq.s32.totalorder %s21, 1
      %p149 = por %p147, %p148
      %p150 = scmp.ne.s32.totalorder %s141, %s142
      %p151 = scmp.eq.s32.totalorder %s21, 0
      %p152 = por %p150, %p151
      %p153 = scmp.ne.s32.totalorder %s141, %s142
      %p154 = scmp.eq.s32.totalorder %s22, 1
      %p155 = por %p153, %p154
      %p157 = scmp.ne.s32.totalorder %s142, %s156
      %p158 = scmp.eq.s32.totalorder %s22, 0
      %p159 = por %p157, %p158
      %s161 = sadd.s32 %s160, 1
      %p164 = scmp.eq.s32.totalorder %s16, 1
      %p165 = scmp.ne.s32.totalorder %s160, %s162
      %p166 = scmp.eq.s32.totalorder %s16, 0
      %p167 = por %p165, %p166
      %p168 = scmp.ne.s32.totalorder %s160, %s162
      %p169 = scmp.eq.s32.totalorder %s21, 1
      %p170 = por %p168, %p169
      %p171 = scmp.ne.s32.totalorder %s162, %s163
      %p172 = scmp.eq.s32.totalorder %s21, 0
      %p173 = por %p171, %p172
      %p174 = scmp.ne.s32.totalorder %s162, %s163
      %p175 = scmp.eq.s32.totalorder %s22, 1
      %p176 = por %p174, %p175
      %p178 = scmp.ne.s32.totalorder %s163, %s177
      %p179 = scmp.eq.s32.totalorder %s22, 0
      %p180 = por %p178, %p179
      %s181 = ssub.s32 %s16, %s23
      %p182 = scmp.eq.s32.totalorder %s181, 0
      %s184 = sadd.s32 %s183, 1
      %s185 = scalar_select %p182, %s183, %s184
      %p188 = pneg %p182
      %p189 = scmp.eq.s32.totalorder %s16, 1
      %p190 = por %p188, %p189
      %p191 = scmp.ne.s32.totalorder %s183, %s186
      %p192 = scmp.eq.s32.totalorder %s16, 0
      %p193 = por %p191, %p192
      %p194 = scmp.ne.s32.totalorder %s183, %s186
      %p195 = scmp.eq.s32.totalorder %s21, 1
      %p196 = por %p194, %p195
      %p197 = scmp.ne.s32.totalorder %s186, %s187
      %p198 = scmp.eq.s32.totalorder %s21, 0
      %p199 = por %p197, %p198
      %p200 = scmp.ne.s32.totalorder %s186, %s187
      %p201 = scmp.eq.s32.totalorder %s22, 1
      %p202 = por %p200, %p201
      %p204 = scmp.ne.s32.totalorder %s187, %s203
      %p205 = scmp.eq.s32.totalorder %s22, 0
      %p206 = por %p204, %p205
      %p207 = scmp.le.s32.totalorder 1, %s16
      %p208 = scmp.lt.s32.totalorder %s16, 3
      %p209 = pnand %p207, %p208
      %p210 = pneg %p209
      // Predicated region
      $region9: #{she_forward.1} parent=5 // pred_check
        _
      $region10: #{she_forward.1} parent=5 // pred_check_branch
        %212 = sbr.rel (%p209) target = $region12
      $region11: #{she_forward.1} parent=5 // pred_region
        %s213 = ssub.s32 %s16, 1
        // Predicated region
        $region13: #{she_forward.1} parent=11 // pred_check
          %p214 = pneg %p89
        $region14: #{she_forward.1} parent=11 // pred_check_branch
          %216 = sbr.rel (%p214) target = $region16
        $region15: #{she_forward.1} parent=11 // pred_region
          _
        $region16: #{she_forward.1} parent=11 // pred_fallthru
          _
        // Predicated region
        $region17: #{she_forward.1} parent=11 // pred_check
          %p217 = pneg %p110
        $region18: #{she_forward.1} parent=11 // pred_check_branch
          %219 = sbr.rel (%p217) target = $region20
        $region19: #{she_forward.1} parent=11 // pred_region
          _
        $region20: #{she_forward.1} parent=11 // pred_fallthru
          _
        // Predicated region
        $region21: #{she_forward.1} parent=11 // pred_check
          %p220 = pneg %p131
        $region22: #{she_forward.1} parent=11 // pred_check_branch
          %222 = sbr.rel (%p220) target = $region24
        $region23: #{she_forward.1} parent=11 // pred_region
          _
        $region24: #{she_forward.1} parent=11 // pred_fallthru
          _
        // Predicated region
        $region25: #{she_forward.1} parent=11 // pred_check
          %p223 = pneg %p152
        $region26: #{she_forward.1} parent=11 // pred_check_branch
          %225 = sbr.rel (%p223) target = $region28
        $region27: #{she_forward.1} parent=11 // pred_region
          _
        $region28: #{she_forward.1} parent=11 // pred_fallthru
          _
        // Predicated region
        $region29: #{she_forward.1} parent=11 // pred_check
          %p226 = pneg %p173
        $region30: #{she_forward.1} parent=11 // pred_check_branch
          %228 = sbr.rel (%p226) target = $region32
        $region31: #{she_forward.1} parent=11 // pred_region
          _
        $region32: #{she_forward.1} parent=11 // pred_fallthru
          _
      $region12: #{she_forward.1} parent=5 // pred_fallthru
        _
      %p229 = scmp.lt.s32.totalorder %s16, 2
      // Predicated region
      $region33: #{she_forward.1} parent=5 // pred_check
        %p230 = pneg %p229
      $region34: #{she_forward.1} parent=5 // pred_check_branch
        %232 = sbr.rel (%p230) target = $region36
      $region35: #{she_forward.1} parent=5 // pred_region
        // Predicated region
        $region37: #{she_forward.1} parent=35 // pred_check
          %p233 = pneg %p36
        $region38: #{she_forward.1} parent=35 // pred_check_branch
          %235 = sbr.rel (%p233) target = $region40
        $region39: #{she_forward.1} parent=35 // pred_region
          %p236 = scmp.lt.s32.totalorder %s16, 1
          %s237 = scalar_select %p236, %s16, 1
          %s238 = smul.addr %s237, 8
          %s239 = smul.addr %s238, 8
          %s240 = scalar_lea.vmem %s0, %s239
        $region40: #{she_forward.1} parent=35 // pred_fallthru
          _
        // Predicated region
        $region41: #{she_forward.1} parent=35 // pred_check
          %p241 = pneg %p62
        $region42: #{she_forward.1} parent=35 // pred_check_branch
          %243 = sbr.rel (%p241) target = $region44
        $region43: #{she_forward.1} parent=35 // pred_region
          %p244 = scmp.lt.s32.totalorder %s16, 1
          %s245 = scalar_select %p244, %s16, 1
          %s246 = smul.addr %s245, 4
          %s247 = smul.addr %s246, 4
          %s248 = scalar_lea.vmem %s1, %s247
        $region44: #{she_forward.1} parent=35 // pred_fallthru
          _
      $region36: #{she_forward.1} parent=5 // pred_fallthru
        _
      %p249 = scmp.le.s32.totalorder 1, %s16
      %p250 = scmp.lt.s32.totalorder %s16, 3
      %p251 = pnand %p249, %p250
      %p252 = pneg %p251
      // Predicated region
      $region45: #{she_forward.1} parent=5 // pred_check
        _
      $region46: #{she_forward.1} parent=5 // pred_check_branch
        %254 = sbr.rel (%p251) target = $region48
      $region47: #{she_forward.1} parent=5 // pred_region
        %s255 = ssub.s32 %s16, 1
        %p256 = scmp.lt.s32.totalorder %s21, 1
        %s257 = scalar_select %p256, %s21, 1
        %s258 = smul.addr %s257, 8
        %s259 = smul.addr %s258, 8
        %s260 = scalar_lea.vmem %s0, %s259
        %p261 = pneg %p42
        %p262 = pneg %p39
        %p263 = scmp.lt.s32.totalorder %s21, 1
        %s264 = scalar_select %p263, %s21, 1
        %s265 = smul.addr %s264, 4
        %s266 = smul.addr %s265, 4
        %s267 = scalar_lea.vmem %s1, %s266
        %p268 = pneg %p68
        %p269 = pneg %p65
        %p270 = pneg %p89
        %p271 = pneg %p86
        %p272 = pneg %p110
        %p273 = pneg %p107
        %p274 = pneg %p131
        %p275 = pneg %p128
        %p276 = pneg %p152
        %p277 = pneg %p149
        %p278 = pneg %p173
        %p279 = pneg %p170
        %p280 = pneg %p199
        %p281 = pneg %p196
        %s282 = sand.u32 %s186, 1
        %s283 = scalar_lea.sflag [#allocation3], %s282
        %s284 = sand.u32 %s186, 1
        %s285 = smul.addr %s284, 16
        %s286 = scalar_lea.vmem [#allocation2], %s285
        %p287 = scmp.lt.s32.totalorder %s21, 1
        %s288 = scalar_select %p287, %s21, 1
        %s289 = smul.addr %s288, 8
        %s290 = smul.addr %s289, 8
        %s291 = scalar_lea.vmem %s0, %s290
        %p292 = scmp.lt.s32.totalorder %s21, 1
        %s293 = scalar_select %p292, %s21, 1
        %s294 = smul.addr %s293, 4
        %s295 = smul.addr %s294, 4
        %s296 = scalar_lea.vmem %s1, %s295
        %v298 = vld [vmem:[%s2] sm:$0xff]
        %v299 = vld [vmem:[%s3] sm:$0xff]
        %v300 = vld [vmem:[%s3 + $0x8] sm:$0xff]
        %v301 = vld [vmem:[%s4] sm:$0x3]
        %v302 = vld [vmem:[%s5] sm:$0xf]
        %v303 = vld [vmem:[%s5 + $0x4] sm:$0xf]
        %v304 = vld [vmem:[%s6] sm:$0xf]
        %v305 = vld [vmem:[%s291] sm:$0xff]
        %v306 = vld [vmem:[%s291 + $0x8] sm:$0xff]
        %v307 = vld [vmem:[%s291 + $0x10] sm:$0xff]
        %v308 = vld [vmem:[%s291 + $0x18] sm:$0xff]
        %v309 = vld [vmem:[%s291 + $0x20] sm:$0xff]
        %v310 = vld [vmem:[%s291 + $0x28] sm:$0xff]
        %v311 = vld [vmem:[%s291 + $0x30] sm:$0xff]
        %v312 = vld [vmem:[%s291 + $0x38] sm:$0xff]
        %vm313 = vcmask 130048
        %v315 = vsel %vm313, %v305, 0
        %v318 = vsel %vm313, %v306, 0
        %v321 = vsel %vm313, %v307, 0
        %v324 = vsel %vm313, %v308, 0
        %v327 = vsel %vm313, %v309, 0
        %v330 = vsel %vm313, %v310, 0
        %v333 = vsel %vm313, %v311, 0
        %v336 = vsel %vm313, %v312, 0
        %338 = vmatpush.msra.mxu0 0.0
        %339 = vmatpush.msra.mxu0 0.0
        %340 = vmatpush.msra.mxu0 0.0
        %341 = vmatpush.msra.mxu0 0.0
        %342 = vmatpush.msra.mxu0 0.0
        %343 = vmatpush.msra.mxu0 0.0
        %344 = vmatpush.msra.mxu0 0.0
        %345 = vmatpush.msra.mxu0 0.0
        %346 = vmatpush.msra.mxu0 0.0
        %347 = vmatpush.msra.mxu0 0.0
        %348 = vmatpush.msra.mxu0 0.0
        %349 = vmatpush.msra.mxu0 0.0
        %350 = vmatpush.msra.mxu0 0.0
        %351 = vmatpush.msra.mxu0 0.0
        %352 = vmatpush.msra.mxu0 %v300
        %353 = vmatpush.msra.mxu0 %v299
        %354 = vmatmul.f32.gmra.mxu0 %v315
        %v355 = vpop.f32.mrf.mxu0
        %v356 = vadd.f32 0.0, %v355
        %357 = vmatmul.f32.gmra.mxu0 %v318
        %v358 = vpop.f32.mrf.mxu0
        %v359 = vadd.f32 0.0, %v358
        %360 = vmatmul.f32.gmra.mxu0 %v321
        %v361 = vpop.f32.mrf.mxu0
        %v362 = vadd.f32 0.0, %v361
        %363 = vmatmul.f32.gmra.mxu0 %v324
        %v364 = vpop.f32.mrf.mxu0
        %v365 = vadd.f32 0.0, %v364
        %366 = vmatmul.f32.gmra.mxu0 %v327
        %v367 = vpop.f32.mrf.mxu0
        %v368 = vadd.f32 0.0, %v367
        %369 = vmatmul.f32.gmra.mxu0 %v330
        %v370 = vpop.f32.mrf.mxu0
        %v371 = vadd.f32 0.0, %v370
        %372 = vmatmul.f32.gmra.mxu0 %v333
        %v373 = vpop.f32.mrf.mxu0
        %v374 = vadd.f32 0.0, %v373
        %375 = vmatmul.f32.gmra.mxu0 %v336
        %v376 = vpop.f32.mrf.mxu0
        %v377 = vadd.f32 0.0, %v376
        %378 = vdwg.mxu0
        %v380 = vsel %vm313, %v298, 0
        %382 = vmatpush.msra.mxu0 0.0
        %383 = vmatpush.msra.mxu0 0.0
        %384 = vmatpush.msra.mxu0 0.0
        %385 = vmatpush.msra.mxu0 0.0
        %386 = vmatpush.msra.mxu0 0.0
        %387 = vmatpush.msra.mxu0 0.0
        %388 = vmatpush.msra.mxu0 0.0
        %389 = vmatpush.msra.mxu0 0.0
        %390 = vmatpush.msra.mxu0 0.0
        %391 = vmatpush.msra.mxu0 0.0
        %392 = vmatpush.msra.mxu0 0.0
        %393 = vmatpush.msra.mxu0 0.0
        %394 = vmatpush.msra.mxu0 0.0
        %395 = vmatpush.msra.mxu0 0.0
        %396 = vmatpush.msra.mxu0 %v359
        %397 = vmatpush.msra.mxu0 %v356
        %398 = vmatmul.f32.gmra.mxu0 %v380
        %v399 = vpop.f32.mrf.mxu0
        %v400 = vadd.f32 0.0, %v399
        %401 = vdwg.mxu0
        %402 = vmatpush.msra.mxu0 0.0
        %403 = vmatpush.msra.mxu0 0.0
        %404 = vmatpush.msra.mxu0 0.0
        %405 = vmatpush.msra.mxu0 0.0
        %406 = vmatpush.msra.mxu0 0.0
        %407 = vmatpush.msra.mxu0 0.0
        %408 = vmatpush.msra.mxu0 0.0
        %409 = vmatpush.msra.mxu0 0.0
        %410 = vmatpush.msra.mxu0 0.0
        %411 = vmatpush.msra.mxu0 0.0
        %412 = vmatpush.msra.mxu0 0.0
        %413 = vmatpush.msra.mxu0 0.0
        %414 = vmatpush.msra.mxu0 0.0
        %415 = vmatpush.msra.mxu0 0.0
        %416 = vmatpush.msra.mxu0 %v365
        %417 = vmatpush.msra.mxu0 %v362
        %418 = vmatmul.f32.gmra.mxu0 %v380
        %v419 = vpop.f32.mrf.mxu0
        %v420 = vadd.f32 0.0, %v419
        %421 = vdwg.mxu0
        %422 = vmatpush.msra.mxu0 0.0
        %423 = vmatpush.msra.mxu0 0.0
        %424 = vmatpush.msra.mxu0 0.0
        %425 = vmatpush.msra.mxu0 0.0
        %426 = vmatpush.msra.mxu0 0.0
        %427 = vmatpush.msra.mxu0 0.0
        %428 = vmatpush.msra.mxu0 0.0
        %429 = vmatpush.msra.mxu0 0.0
        %430 = vmatpush.msra.mxu0 0.0
        %431 = vmatpush.msra.mxu0 0.0
        %432 = vmatpush.msra.mxu0 0.0
        %433 = vmatpush.msra.mxu0 0.0
        %434 = vmatpush.msra.mxu0 0.0
        %435 = vmatpush.msra.mxu0 0.0
        %436 = vmatpush.msra.mxu0 %v371
        %437 = vmatpush.msra.mxu0 %v368
        %438 = vmatmul.f32.gmra.mxu0 %v380
        %v439 = vpop.f32.mrf.mxu0
        %v440 = vadd.f32 0.0, %v439
        %441 = vdwg.mxu0
        %442 = vmatpush.msra.mxu0 0.0
        %443 = vmatpush.msra.mxu0 0.0
        %444 = vmatpush.msra.mxu0 0.0
        %445 = vmatpush.msra.mxu0 0.0
        %446 = vmatpush.msra.mxu0 0.0
        %447 = vmatpush.msra.mxu0 0.0
        %448 = vmatpush.msra.mxu0 0.0
        %449 = vmatpush.msra.mxu0 0.0
        %450 = vmatpush.msra.mxu0 0.0
        %451 = vmatpush.msra.mxu0 0.0
        %452 = vmatpush.msra.mxu0 0.0
        %453 = vmatpush.msra.mxu0 0.0
        %454 = vmatpush.msra.mxu0 0.0
        %455 = vmatpush.msra.mxu0 0.0
        %456 = vmatpush.msra.mxu0 %v377
        %457 = vmatpush.msra.mxu0 %v374
        %458 = vmatmul.f32.gmra.mxu0 %v380
        %v459 = vpop.f32.mrf.mxu0
        %v460 = vadd.f32 0.0, %v459
        %461 = vdwg.mxu0
        %v462 = vld [vmem:[%s296] sm:$0xf]
        %v463 = vld [vmem:[%s296 + $0x4] sm:$0xf]
        %v464 = vld [vmem:[%s296 + $0x8] sm:$0xf]
        %v465 = vld [vmem:[%s296 + $0xc] sm:$0xf]
        %v470 = vunpack.c.l.b16 %v462
        %v471 = vunpack.c.l.b16 %v463
        %v472 = vunpack.c.l.b16 %v464
        %v473 = vunpack.c.l.b16 %v465
        %v474 = vpack.c.b16 %v471, %v470
        %v475 = vpack.c.b16 %v473, %v472
        %vm478 = vcmask 261120
        %v480 = vsel %vm478, %v301, 0
        %482 = vmatpush.bf16.msra.mxu0 0
        %483 = vmatpush.bf16.msra.mxu0 0
        %484 = vmatpush.bf16.msra.mxu0 0
        %485 = vmatpush.bf16.msra.mxu0 0
        %486 = vmatpush.bf16.msra.mxu0 0
        %487 = vmatpush.bf16.msra.mxu0 0
        %488 = vmatpush.bf16.msra.mxu0 %v475
        %489 = vmatpush.bf16.msra.mxu0 %v474
        %490 = vmatmul.bf16.gmra.mxu0 %v480
        %v491 = vpop.f32.mrf.mxu0
        %v492 = vadd.f32 0.0, %v491
        %v493 = vpop.f32.mrf.mxu0
        %494 = vdwg.mxu0
        %496 = vrot.lane.b32.xlu0 %v492, 120
        %v497 = vpop.permute.xlu0 %496
        %499 = vrot.lane.b32.xlu0 %v492, 112
        %v500 = vpop.permute.xlu0 %499
        %502 = vrot.lane.b32.xlu0 %v492, 104
        %v503 = vpop.permute.xlu0 %502
        %505 = vrot.lane.b32.xlu0 %v492, 96
        %v506 = vpop.permute.xlu0 %505
        %508 = vrot.lane.b32.xlu0 %v492, 88
        %v509 = vpop.permute.xlu0 %508
        %511 = vrot.lane.b32.xlu0 %v492, 80
        %v512 = vpop.permute.xlu0 %511
        %514 = vrot.lane.b32.xlu0 %v492, 72
        %v515 = vpop.permute.xlu0 %514
        %v517 = vrot.slane %v500, 4
        %vm518 = vcmask 1047556
        %v519 = vsel %vm518, %v517, %v492
        %v521 = vunpack.c.l.s4 1983009808
        %v522 = vunpack.c.0.s8 %v521
        %v523 = vperm.slane %v519, %v522
        %v524 = vrot.slane %v503, 4
        %v525 = vsel %vm518, %v524, %v497
        %v527 = vunpack.c.l.s4 1983009808
        %v528 = vunpack.c.0.s8 %v527
        %v529 = vperm.slane %v525, %v528
        %v530 = vrot.slane %v512, 4
        %v531 = vsel %vm518, %v530, %v506
        %v533 = vunpack.c.l.s4 1983009808
        %v534 = vunpack.c.0.s8 %v533
        %v535 = vperm.slane %v531, %v534
        %v536 = vrot.slane %v515, 4
        %v537 = vsel %vm518, %v536, %v509
        %v539 = vunpack.c.l.s4 1983009808
        %v540 = vunpack.c.0.s8 %v539
        %v541 = vperm.slane %v537, %v540
        %v542 = vrot.slane %v529, 4
        %v543 = vsel %vm518, %v542, %v523
        %v544 = vrot.slane %v523, 4
        %v545 = vsel %vm518, %v529, %v544
        %v547 = vunpack.c.l.s4 1934713408
        %v548 = vunpack.c.0.s8 %v547
        %v549 = vperm.slane %v543, %v548
        %v551 = vunpack.c.l.s4 1934713408
        %v552 = vunpack.c.0.s8 %v551
        %v553 = vperm.slane %v545, %v552
        %v554 = vrot.slane %v541, 4
        %v555 = vsel %vm518, %v554, %v535
        %v556 = vrot.slane %v535, 4
        %v557 = vsel %vm518, %v541, %v556
        %v559 = vunpack.c.l.s4 1934713408
        %v560 = vunpack.c.0.s8 %v559
        %v561 = vperm.slane %v555, %v560
        %v563 = vunpack.c.l.s4 1934713408
        %v564 = vunpack.c.0.s8 %v563
        %v565 = vperm.slane %v557, %v564
        %v566 = vrot.slane %v561, 4
        %v567 = vsel %vm518, %v566, %v549
        %v568 = vrot.slane %v549, 4
        %v569 = vsel %vm518, %v561, %v568
        %v570 = vrot.slane %v565, 4
        %v571 = vsel %vm518, %v570, %v553
        %v572 = vrot.slane %v553, 4
        %v573 = vsel %vm518, %v565, %v572
        %vm574 = vcmp.gt.f32.partialorder %v420, %v400
        %v575 = vsel %vm574, %v420, %v400
        %v576 = vsel %vm574, %v569, %v567
        %vm577 = vcmp.gt.f32.partialorder %v440, %v575
        %v578 = vsel %vm577, %v440, %v575
        %v579 = vsel %vm577, %v571, %v576
        %vm580 = vcmp.gt.f32.partialorder %v460, %v578
        %v581 = vsel %vm580, %v573, %v579
        %v582 = vpack.c.bf16 %v581, %v581
        %v585 = vunpack.c.l.b16 %v302
        %v586 = vunpack.c.l.b16 %v303
        %v587 = vpack.c.b16 %v586, %v585
        %vm588 = vcmask 64512
        %v590 = vsel %vm588, %v587, 0
        %vm592 = vcmask 1043456
        %v594 = vsel %vm592, %v582, 0
        %596 = vmatpush.bf16.msra.mxu0 0
        %597 = vmatpush.bf16.msra.mxu0 0
        %598 = vmatpush.bf16.msra.mxu0 0
        %599 = vmatpush.bf16.msra.mxu0 0
        %600 = vmatpush.bf16.msra.mxu0 0
        %601 = vmatpush.bf16.msra.mxu0 0
        %602 = vmatpush.bf16.msra.mxu0 0
        %603 = vmatpush.bf16.msra.mxu0 %v594
        %604 = vmatmul.bf16.gmra.mxu0 %v590
        %v605 = vpop.f32.mrf.mxu0
        %v606 = vadd.f32 0.0, %v605
        %v607 = vpop.f32.mrf.mxu0
        %v608 = vadd.f32 0.0, %v607
        %609 = vdwg.mxu0
        %v610 = vpack.c.bf16 %v608, %v606
        %v612 = vsel %vm588, %v610, 0
        %v615 = vsel %vm592, %v304, 0
        %617 = vmatpush.bf16.msra.mxu0 0
        %618 = vmatpush.bf16.msra.mxu0 0
        %619 = vmatpush.bf16.msra.mxu0 0
        %620 = vmatpush.bf16.msra.mxu0 0
        %621 = vmatpush.bf16.msra.mxu0 0
        %622 = vmatpush.bf16.msra.mxu0 0
        %623 = vmatpush.bf16.msra.mxu0 0
        %624 = vmatpush.bf16.msra.mxu0 %v615
        %625 = vmatmul.bf16.gmra.mxu0 %v612
        %v626 = vpop.f32.mrf.mxu0
        %v627 = vadd.f32 0.0, %v626
        %v628 = vpop.f32.mrf.mxu0
        %v629 = vadd.f32 0.0, %v628
        %630 = vdwg.mxu0
        %631 = vst.msk [vmem:[%s286] sm:$0xff] %vm313, %v627
        %632 = vst.msk [vmem:[%s286 + $0x8] sm:$0xff] %vm313, %v629
        %s633 = sand.u32 %s186, 1
        %s634 = scalar_lea.sflag [#allocation3], %s633
        %s635 = sand.u32 %s186, 1
        %s636 = smul.addr %s635, 16
        %s637 = scalar_lea.vmem [#allocation2], %s636
        // Predicated region
        $region49: #{she_forward.1} parent=47 // pred_check
          %p638 = pneg %p196
        $region50: #{she_forward.1} parent=47 // pred_check_branch
          %640 = sbr.rel (%p638) target = $region52
        $region51: #{she_forward.1} parent=47 // pred_region
          %642 = vsyncadd %s634, 0
          %s643 = smul.addr %s21, 2
          %s644 = smul.addr %s643, 8
          %s645 = scalar_lea.hbm %s7, %s644
          %s646 = sshll.u32 %s637, 4
          %s647 = int_to_ptr.vmem [resolvable:$true] %s646
          %s648 = sshll.u32 %s645, 4
          %s649 = int_to_ptr.hbm [resolvable:$true] %s648
          %654 = dma.vmem_to_hbm [thread:$0]  %s647, 256, %s649, %s634, 128, 128, 8
        $region52: #{she_forward.1} parent=47 // pred_fallthru
          _
      $region48: #{she_forward.1} parent=5 // pred_fallthru
        _
      %p655 = scmp.le.s32.totalorder 2, %s16
      // Predicated region
      $region53: #{she_forward.1} parent=5 // pred_check
        %p656 = pneg %p655
      $region54: #{she_forward.1} parent=5 // pred_check_branch
        %658 = sbr.rel (%p656) target = $region56
      $region55: #{she_forward.1} parent=5 // pred_region
        %s659 = ssub.s32 %s16, 2
        // Predicated region
        $region57: #{she_forward.1} parent=55 // pred_check
          %p660 = pneg %p202
        $region58: #{she_forward.1} parent=55 // pred_check_branch
          %662 = sbr.rel (%p660) target = $region60
        $region59: #{she_forward.1} parent=55 // pred_region
          %s663 = sand.u32 %s187, 1
          %s664 = scalar_lea.sflag [#allocation3], %s663
          %s665 = sand.u32 %s187, 1
          %s666 = smul.addr %s665, 16
          %s667 = scalar_lea.vmem [#allocation2], %s666
          %669 = dma.done %s664, 256
        $region60: #{she_forward.1} parent=55 // pred_fallthru
          _
      $region56: #{she_forward.1} parent=5 // pred_fallthru
        _
    $region6: #{she_forward.1} parent=1 // loop_footer
      %s20 = sadd.s32 1, %s16
    $region7: #{she_forward.1} parent=1 // loop_footer_branch
      %15 = sbr.rel target = $region3
    $region8: #{she_forward.1} parent=1 // loop_exit
      _
    %670 = vsyncpa [#allocation3], 1
    %s671 = scalar_lea.sflag [#allocation3], 1
    %672 = vsyncpa %s671, 1

</llo_original>
